<compile_context>
chip_gen: v5e
topology: v5e:2x2
jax: 0.10.0
libtpu: 0.0.40
codegen_flags: <defaults>
</compile_context>

<pallas_src>
import jax
import jax.numpy as jnp
from jax.experimental import pallas as pl
from jax.experimental.pallas import tpu as pltpu


def get_rot_transformation_mat(dhead: int) -> jnp.ndarray:
    """JAX port of the torch helper (returns (dhead, dhead); torch adds (1,1) dims)."""
    m = jnp.zeros((dhead, dhead), dtype=jnp.float32)
    even = jnp.arange(0, dhead, 2)
    odd = jnp.arange(1, dhead, 2)
    m = m.at[even, odd].set(1.0)
    m = m.at[odd, even].set(-1.0)
    return m


def _fused_rope_kernel(xq_ref, xk_ref, cos_ref, sin_e_ref, sin_o_ref,
                       oq_ref, ok_ref):
    """xq_ref/oq_ref: (bq, S_BLK, D); xk_ref/ok_ref: (bk, S_BLK, D);
    cos/sin_e/sin_o: (S_BLK, D) f32 with signs folded into the sin tables.

    rot = x @ T is a signed permutation:
        rot[..., 2i]   = -x[..., 2i+1]
        rot[..., 2i+1] =  x[..., 2i]
    implemented as lane rotations (XLU) with sign-folded sin tables (VPU FMAs),
    no MXU matmul and no per-block iota/select.
    """
    cos = cos_ref[...]
    sin_e = sin_e_ref[...]
    sin_o = sin_o_ref[...]
    for x_ref, o_ref in ((xq_ref, oq_ref), (xk_ref, ok_ref)):
        x = x_ref[...].astype(jnp.float32)
        d = x.shape[-1]
        ax = x.ndim - 1
        # pltpu.roll follows jnp.roll semantics: roll(x, s)[j] = x[(j - s) % d]
        x_next = pltpu.roll(x, shift=d - 1, axis=ax)   # x_next[j] = x[(j+1) % d]
        x_prev = pltpu.roll(x, shift=1, axis=ax)       # x_prev[j] = x[(j-1) % d]
        out = x * cos[None] + x_next * sin_e[None] + x_prev * sin_o[None]
        o_ref[...] = out.astype(o_ref.dtype)


def _choose_blocks(nk, r, S, D, itemsize, target_bytes, min_steps):
    """Pick (bk heads per k block, S_BLK seq rows per block).

    bq = r * bk (GQA-aligned) so q and k share the same head-grid extent.
    """
    # Sequence block: multiple of 8 (sublane), or the full S if S % 8 != 0.
    s_blk = min(S, 512) if (S % 8 == 0) else S

    def q_block_bytes(bk_, s_):
        return r * bk_ * s_ * D * itemsize

    # Even a single k-head group can be too large (MQA, long S): shrink S_BLK.
    while (S % 8 == 0) and s_blk > 8 and q_block_bytes(1, s_blk) > target_bytes:
        s_blk = max(8, (s_blk // 2 // 8) * 8)

    bk = max(1, int(target_bytes // max(1, q_block_bytes(1, s_blk))))
    bk = min(bk, nk)

    def steps(bk_, s_):
        return pl.cdiv(nk, bk_) * pl.cdiv(S, s_)

    # Grow the grid (>= min_steps) so both v7x cores get several steps and the
    # pipeline has real DMA/compute overlap; prefer splitting heads first.
    while steps(bk, s_blk) < min_steps and bk > 1:
        bk = max(1, bk // 2)
    while steps(bk, s_blk) < min_steps and (S % 8 == 0) and s_blk > 8:
        s_blk = max(8, (s_blk // 2 // 8) * 8)
    return bk, s_blk


def llama_rotary_multiply_add(xq, xk, cos, sin, *,
                              target_block_bytes=2 << 20, min_grid_steps=8):
    """Reproduces PytorchLlamaRotaryMultiplyAddModel.forward.

    xq: (B, H, S, D), xk: (B, Hk, S, D), cos/sin broadcastable to (S, D).
    Returns (xq_out, xk_out) with the same shapes/dtypes as the inputs.
    """
    B, H, S, D = xq.shape
    Bk, Hk, Sk, Dk = xk.shape
    assert (Bk, Sk, Dk) == (B, S, D), "xq/xk must share batch, seq and head_dim"
    assert D % 2 == 0, "rotate-half rotary requires an even head_dim"

    cos2 = jnp.asarray(cos, jnp.float32).reshape(S, D)
    sin2 = jnp.asarray(sin, jnp.float32).reshape(S, D)
    # Sign-folded sin tables (computed once in the wrapper, not per block):
    #   out = x*cos + x_next*sin_even + x_prev*sin_odd
    lane_even = (jnp.arange(D) % 2) == 0
    sin_e = jnp.where(lane_even[None, :], -sin2, 0.0)
    sin_o = jnp.where(lane_even[None, :], 0.0, sin2)

    nq, nk = B * H, B * Hk
    r = pl.cdiv(nq, nk)          # GQA ratio (== H // Hk in the usual case)
    nq_pad = r * nk
    xq2 = xq.reshape(nq, S, D)
    xk2 = xk.reshape(nk, S, D)
    if nq_pad != nq:             # only if nq is not a multiple of nk
        xq2 = jnp.pad(xq2, ((0, nq_pad - nq), (0, 0), (0, 0)))

    itemsize = jnp.dtype(xq.dtype).itemsize
    bk, s_blk = _choose_blocks(nk, r, S, D, itemsize,
                               target_block_bytes, min_grid_steps)
    bq = r * bk                                   # q heads per step
    gh = pl.cdiv(nk, bk)                          # == cdiv(nq_pad, bq)
    gs = pl.cdiv(S, s_blk)

    # Identity index maps — no clamping, no block re-processing. Partial
    # trailing blocks (if any) are masked by Pallas.
    q_map = lambda h, s: (h, s, 0)
    k_map = lambda h, s: (h, s, 0)
    cs_map = lambda h, s: (s, 0)

    n_elems = (nq + nk) * S * D
    cost = pl.CostEstimate(
        flops=int(6 * n_elems),
        transcendentals=0,
        bytes_accessed=int(2 * (nq + nk) * S * D * itemsize + 3 * S * D * 4),
    )

    oq, ok = pl.pallas_call(
        _fused_rope_kernel,
        out_shape=(
            jax.ShapeDtypeStruct((nq_pad, S, D), xq.dtype),
            jax.ShapeDtypeStruct((nk, S, D), xk.dtype),
        ),
        grid=(gh, gs),
        in_specs=[
            pl.BlockSpec((bq, s_blk, D), q_map),
            pl.BlockSpec((bk, s_blk, D), k_map),
            pl.BlockSpec((s_blk, D), cs_map),
            pl.BlockSpec((s_blk, D), cs_map),
            pl.BlockSpec((s_blk, D), cs_map),
        ],
        out_specs=(
            pl.BlockSpec((bq, s_blk, D), q_map),
            pl.BlockSpec((bk, s_blk, D), k_map),
        ),
        compiler_params=pltpu.CompilerParams(
            dimension_semantics=("parallel", "parallel"),
            vmem_limit_bytes=40 * 1024 * 1024,
        ),
        cost_estimate=cost,
    )(xq2, xk2, cos2, sin_e, sin_o)

    if nq_pad != nq:
        oq = oq[:nq]
    return oq.reshape(B, H, S, D), ok.reshape(B, Hk, S, D)


if __name__ == "__main__":
    # Small synthetic shapes consistent with the llama rotary module
    # (head_dim = 128 = lane width; n_kv_heads < n_heads as in GQA).
    batch = 2
    n_heads = 8
    n_kv_heads = 2
    seq = 8
    head_dim = 128

    key = jax.random.PRNGKey(0)
    k_q, k_k, k_ang = jax.random.split(key, 3)

    xq = jax.random.normal(k_q, (batch, n_heads, seq, head_dim), dtype=jnp.float32)
    xk = jax.random.normal(k_k, (batch, n_kv_heads, seq, head_dim), dtype=jnp.float32)

    angles = jax.random.uniform(k_ang, (seq, head_dim), dtype=jnp.float32) * 6.28318
    cos = jnp.cos(angles)
    sin = jnp.sin(angles)

    xq_out, xk_out = jax.jit(llama_rotary_multiply_add)(xq, xk, cos, sin)
    jax.block_until_ready((xq_out, xk_out))

    # Correctness check against a pure-JAX reference that mirrors the torch
    # module exactly: x * cos + (x @ T) * sin  (T built by the same helper).
    tmat = get_rot_transformation_mat(head_dim)

    def _reference_apply_rotary(x):
        rot = jnp.einsum("bhsd,de->bhse", x, tmat,
                         precision=jax.lax.Precision.HIGHEST)
        return x * cos[None, None] + rot * sin[None, None]

    ref_q = _reference_apply_rotary(xq)
    ref_k = _reference_apply_rotary(xk)
    assert jnp.allclose(xq_out, ref_q, atol=1e-4, rtol=1e-4), "xq mismatch"
    assert jnp.allclose(xk_out, ref_k, atol=1e-4, rtol=1e-4), "xk mismatch"

    print("KERNEL_OK")
</pallas_src>

<mosaic_0001>
module attributes {stable_mosaic.version = 11 : i64} {
  func.func @_fused_rope_kernel(%arg0: i32, %arg1: i32, %arg2: memref<4x8x128xf32, #tpu.memory_space<vmem>>, %arg3: memref<1x8x128xf32, #tpu.memory_space<vmem>>, %arg4: memref<8x128xf32, #tpu.memory_space<vmem>>, %arg5: memref<8x128xf32, #tpu.memory_space<vmem>>, %arg6: memref<8x128xf32, #tpu.memory_space<vmem>>, %arg7: memref<4x8x128xf32, #tpu.memory_space<vmem>>, %arg8: memref<1x8x128xf32, #tpu.memory_space<vmem>>) attributes {dimension_semantics = [#tpu.dimension_semantics<parallel>, #tpu.dimension_semantics<parallel>], iteration_bounds = array<i64: 4, 1>, scalar_prefetch = 0 : i64, scratch_operands = 0 : i64, tpu.core_type = #tpu.core_type<tc>, window_params = [{transform_indices = @transform_0, window_bounds = array<i64: 4, 8, 128>}, {transform_indices = @transform_1, window_bounds = array<i64: 1, 8, 128>}, {transform_indices = @transform_2, window_bounds = array<i64: 8, 128>}, {transform_indices = @transform_3, window_bounds = array<i64: 8, 128>}, {transform_indices = @transform_4, window_bounds = array<i64: 8, 128>}, {transform_indices = @transform_5, window_bounds = array<i64: 4, 8, 128>}, {transform_indices = @transform_6, window_bounds = array<i64: 1, 8, 128>}]} {
    %c0 = arith.constant 0 : index
    %c0_0 = arith.constant 0 : index
    %0 = vector.load %arg4[%c0, %c0_0] : memref<8x128xf32, #tpu.memory_space<vmem>>, vector<8x128xf32>
    %c0_1 = arith.constant 0 : index
    %c0_2 = arith.constant 0 : index
    %1 = vector.load %arg5[%c0_1, %c0_2] : memref<8x128xf32, #tpu.memory_space<vmem>>, vector<8x128xf32>
    %c0_3 = arith.constant 0 : index
    %c0_4 = arith.constant 0 : index
    %2 = vector.load %arg6[%c0_3, %c0_4] : memref<8x128xf32, #tpu.memory_space<vmem>>, vector<8x128xf32>
    %c0_5 = arith.constant 0 : index
    %c0_6 = arith.constant 0 : index
    %c0_7 = arith.constant 0 : index
    %3 = vector.load %arg2[%c0_5, %c0_6, %c0_7] : memref<4x8x128xf32, #tpu.memory_space<vmem>>, vector<4x8x128xf32>
    %c127_i32 = arith.constant 127 : i32
    %4 = tpu.dynamic_rotate %3 by %c127_i32 dim 2 : vector<4x8x128xf32>, i32 -> vector<4x8x128xf32>
    %c1_i32 = arith.constant 1 : i32
    %5 = tpu.dynamic_rotate %3 by %c1_i32 dim 2 : vector<4x8x128xf32>, i32 -> vector<4x8x128xf32>
    %6 = vector.shape_cast %0 : vector<8x128xf32> to vector<1x8x128xf32>
    %7 = vector.broadcast %6 : vector<1x8x128xf32> to vector<4x8x128xf32>
    %8 = arith.mulf %3, %7 : vector<4x8x128xf32>
    %9 = vector.shape_cast %1 : vector<8x128xf32> to vector<1x8x128xf32>
    %10 = vector.broadcast %9 : vector<1x8x128xf32> to vector<4x8x128xf32>
    %11 = arith.mulf %4, %10 : vector<4x8x128xf32>
    %12 = arith.addf %8, %11 : vector<4x8x128xf32>
    %13 = vector.shape_cast %2 : vector<8x128xf32> to vector<1x8x128xf32>
    %14 = vector.broadcast %13 : vector<1x8x128xf32> to vector<4x8x128xf32>
    %15 = arith.mulf %5, %14 : vector<4x8x128xf32>
    %16 = arith.addf %12, %15 : vector<4x8x128xf32>
    %c0_8 = arith.constant 0 : index
    %c0_9 = arith.constant 0 : index
    %c0_10 = arith.constant 0 : index
    %17 = vector.load %arg7[%c0_8, %c0_9, %c0_10] : memref<4x8x128xf32, #tpu.memory_space<vmem>>, vector<4x8x128xf32>
    tpu.vector_store %arg7[%c0_8, %c0_9, %c0_10], %16 {strides = array<i32>} : memref<4x8x128xf32, #tpu.memory_space<vmem>>, vector<4x8x128xf32>,
    %c0_11 = arith.constant 0 : index
    %c0_12 = arith.constant 0 : index
    %c0_13 = arith.constant 0 : index
    %18 = vector.load %arg3[%c0_11, %c0_12, %c0_13] : memref<1x8x128xf32, #tpu.memory_space<vmem>>, vector<1x8x128xf32>
    %c127_i32_14 = arith.constant 127 : i32
    %19 = tpu.dynamic_rotate %18 by %c127_i32_14 dim 2 : vector<1x8x128xf32>, i32 -> vector<1x8x128xf32>
    %c1_i32_15 = arith.constant 1 : i32
    %20 = tpu.dynamic_rotate %18 by %c1_i32_15 dim 2 : vector<1x8x128xf32>, i32 -> vector<1x8x128xf32>
    %21 = vector.shape_cast %0 : vector<8x128xf32> to vector<1x8x128xf32>
    %22 = arith.mulf %18, %21 : vector<1x8x128xf32>
    %23 = vector.shape_cast %1 : vector<8x128xf32> to vector<1x8x128xf32>
    %24 = arith.mulf %19, %23 : vector<1x8x128xf32>
    %25 = arith.addf %22, %24 : vector<1x8x128xf32>
    %26 = vector.shape_cast %2 : vector<8x128xf32> to vector<1x8x128xf32>
    %27 = arith.mulf %20, %26 : vector<1x8x128xf32>
    %28 = arith.addf %25, %27 : vector<1x8x128xf32>
    %c0_16 = arith.constant 0 : index
    %c0_17 = arith.constant 0 : index
    %c0_18 = arith.constant 0 : index
    %29 = vector.load %arg8[%c0_16, %c0_17, %c0_18] : memref<1x8x128xf32, #tpu.memory_space<vmem>>, vector<1x8x128xf32>
    tpu.vector_store %arg8[%c0_16, %c0_17, %c0_18], %28 {strides = array<i32>} : memref<1x8x128xf32, #tpu.memory_space<vmem>>, vector<1x8x128xf32>,
    return
  }
  func.func @transform_0(%arg0: i32, %arg1: i32) -> (i32, i32, i32) {
    %c0_i32 = arith.constant 0 : i32
    %c0_i32_0 = arith.constant 0 : i32
    return %arg0, %arg1, %c0_i32 : i32, i32, i32
  }
  func.func @transform_1(%arg0: i32, %arg1: i32) -> (i32, i32, i32) {
    %c0_i32 = arith.constant 0 : i32
    %c0_i32_0 = arith.constant 0 : i32
    return %arg0, %arg1, %c0_i32 : i32, i32, i32
  }
  func.func @transform_2(%arg0: i32, %arg1: i32) -> (i32, i32) {
    %c0_i32 = arith.constant 0 : i32
    %c0_i32_0 = arith.constant 0 : i32
    return %arg1, %c0_i32 : i32, i32
  }
  func.func @transform_3(%arg0: i32, %arg1: i32) -> (i32, i32) {
    %c0_i32 = arith.constant 0 : i32
    %c0_i32_0 = arith.constant 0 : i32
    return %arg1, %c0_i32 : i32, i32
  }
  func.func @transform_4(%arg0: i32, %arg1: i32) -> (i32, i32) {
    %c0_i32 = arith.constant 0 : i32
    %c0_i32_0 = arith.constant 0 : i32
    return %arg1, %c0_i32 : i32, i32
  }
  func.func @transform_5(%arg0: i32, %arg1: i32) -> (i32, i32, i32) {
    %c0_i32 = arith.constant 0 : i32
    %c0_i32_0 = arith.constant 0 : i32
    return %arg0, %arg1, %c0_i32 : i32, i32, i32
  }
  func.func @transform_6(%arg0: i32, %arg1: i32) -> (i32, i32, i32) {
    %c0_i32 = arith.constant 0 : i32
    %c0_i32_0 = arith.constant 0 : i32
    return %arg0, %arg1, %c0_i32 : i32, i32, i32
  }
}

</mosaic_0001>

<llo_original>
// kernel: llama_rotary_multiply_add.1
$region0: #{llama_rotary_multiply_add.1}
  #allocation0 [shape = 'u32[]', space=smem, size = 0x4, offset = 0x4, fixed_abs, tag = 'smem constant byte address 0x4 - core index']
  #allocation1 [shape = 'u32[72,128]{1,0:T(1,128)}', space=vmem, size = 0x9000, scoped, tag = 'internal scratch']
  %s0 = inlined_call_operand.hbm [shape: f32[16,8,128], index: 0, kind: input, shape index: {}]
  %s1 = inlined_call_operand.hbm [shape: f32[4,8,128], index: 1, kind: input, shape index: {}]
  %s2 = inlined_call_operand.vmem [shape: f32[8,128], index: 2, kind: input, shape index: {}]
  %s3 = inlined_call_operand.vmem [shape: f32[8,128], index: 3, kind: input, shape index: {}]
  %s4 = inlined_call_operand.vmem [shape: f32[8,128], index: 4, kind: input, shape index: {}]
  %s5 = inlined_call_operand.hbm [shape: f32[16,8,128], index: 5, kind: output, shape index: {0}]
  %s6 = inlined_call_operand.hbm [shape: f32[4,8,128], index: 6, kind: output, shape index: {1}]
  %7 = xla_tuple %s5, %s6
  %s8 = sld [smem:[#allocation0]]
  $region69: #{llama_rotary_multiply_add.1} parent=0
    _
  %s10 = ssub.s32 1, %s8
  %s11 = scalar_select 0, %s10, %s8
  $region1: #{llama_rotary_multiply_add.1} parent=0
    #allocation2 [shape = 'u8[32768]{0}', space=vmem, size = 0x8000, scoped, tag = 'input window, operand 0']
    #allocation3 [shape = 's32[2]{0}', space=sflag, size = 0x8, scoped, tag = 'scoped memory for llama_rotary_multiply_add.1']
    #allocation4 [shape = 's32[2]{0}', space=sflag, size = 0x8, scoped, tag = 'scoped memory for llama_rotary_multiply_add.1']
    #allocation5 [shape = 'u8[8192]{0}', space=vmem, size = 0x2000, scoped, tag = 'input window, operand 1']
    #allocation6 [shape = 's32[2]{0}', space=sflag, size = 0x8, scoped, tag = 'scoped memory for llama_rotary_multiply_add.1']
    #allocation7 [shape = 'u8[32768]{0}', space=vmem, size = 0x8000, scoped, tag = 'output window, operand 0']
    #allocation8 [shape = 'u8[8192]{0}', space=vmem, size = 0x2000, scoped, tag = 'output window, operand 1']
    #allocation9 [shape = 's32[2]{0}', space=sflag, size = 0x8, scoped, tag = 'scoped memory for llama_rotary_multiply_add.1']
    %12 = vsyncpa [#allocation3], 0
    %s13 = scalar_lea.sflag [#allocation3], 1
    %14 = vsyncpa %s13, 0
    %15 = vsyncpa [#allocation6], 0
    %s16 = scalar_lea.sflag [#allocation6], 1
    %17 = vsyncpa %s16, 0
    %18 = vsyncpa [#allocation4], 0
    %s19 = scalar_lea.sflag [#allocation4], 1
    %20 = vsyncpa %s19, 0
    %21 = vsyncpa [#allocation9], 0
    %s22 = scalar_lea.sflag [#allocation9], 1
    %23 = vsyncpa %s22, 0
    loop: start=0, step=1, limit=6
    $region2: #{llama_rotary_multiply_add.1} parent=1 // loop_pre_header
      _
    $region3: #{llama_rotary_multiply_add.1} parent=1 // loop_header
      %s25 = sphi 0, %s29
      %p26 = scmp.ge.s32.totalorder %s25, 6
      %s32 = sphi 0, %s44
      %s33 = sphi 0, %s40
      %s34 = sphi 0, %s32
      %s35 = sphi 0, %s33
      %s36 = sphi 0, %s34
      %s37 = sphi 0, %s35
      %s49 = sphi 0, %s51
      %s52 = sphi 0, %s49
      %s53 = sphi 0, %s52
      %s69 = sphi 0, %s53
      %s77 = sphi 0, %s79
      %s80 = sphi 0, %s77
      %s81 = sphi 0, %s80
      %s97 = sphi 0, %s81
      %s103 = sphi 0, %s105
      %s106 = sphi 0, %s103
      %s107 = sphi 0, %s106
      %s123 = sphi 0, %s107
      %s129 = sphi 0, %s131
      %s132 = sphi 0, %s129
      %s133 = sphi 0, %s132
      %s149 = sphi 0, %s133
      %s155 = sphi 0, %s157
      %s158 = sphi 0, %s155
      %s159 = sphi 0, %s158
      %s175 = sphi 0, %s159
      %s183 = sphi 0, %s185
      %s186 = sphi 0, %s183
      %s187 = sphi 0, %s186
      %s203 = sphi 0, %s187
      %s211 = sphi 0, %s213
      %s214 = sphi 0, %s211
      %s215 = sphi 0, %s214
      %s231 = sphi 0, %s215
    $region4: #{llama_rotary_multiply_add.1} parent=1 // loop_header_branch
      %28 = sbr.rel (%p26) target = $region8
    $region5: #{llama_rotary_multiply_add.1} parent=1 // loop_body
      %s30 = ssub.s32 %s25, 1
      %s31 = ssub.s32 %s25, 2
      %s38 = sadd.s32 1, %s33
      %p39 = scmp.ge.s32.totalorder %s38, 1
      %s40 = scalar_select %p39, 0, %s38
      %s41 = sadd.s32 1, %s32
      %s42 = scalar_select %p39, %s41, %s32
      %p43 = scmp.ge.s32.totalorder %s42, 4
      %s44 = scalar_select %p43, 0, %s42
      %s45 = ssub.s32 %s32, %s44
      %s46 = ssub.s32 %s33, %s40
      %s47 = sor.u32 %s45, %s46
      %p48 = scmp.eq.s32.totalorder %s47, 0
      %s50 = sadd.s32 %s49, 1
      %s51 = scalar_select %p48, %s49, %s50
      %p54 = pneg %p48
      %p55 = scmp.eq.s32.totalorder %s25, 3
      %p56 = por %p54, %p55
      %p57 = scmp.ne.s32.totalorder %s49, %s52
      %p58 = scmp.eq.s32.totalorder %s25, 0
      %p59 = por %p57, %p58
      %p60 = scmp.ne.s32.totalorder %s49, %s52
      %p61 = scmp.eq.s32.totalorder %s30, 3
      %p62 = por %p60, %p61
      %p63 = scmp.ne.s32.totalorder %s52, %s53
      %p64 = scmp.eq.s32.totalorder %s30, 0
      %p65 = por %p63, %p64
      %p66 = scmp.ne.s32.totalorder %s52, %s53
      %p67 = scmp.eq.s32.totalorder %s31, 3
      %p68 = por %p66, %p67
      %p70 = scmp.ne.s32.totalorder %s53, %s69
      %p71 = scmp.eq.s32.totalorder %s31, 0
      %p72 = por %p70, %p71
      %s73 = ssub.s32 %s32, %s44
      %s74 = ssub.s32 %s33, %s40
      %s75 = sor.u32 %s73, %s74
      %p76 = scmp.eq.s32.totalorder %s75, 0
      %s78 = sadd.s32 %s77, 1
      %s79 = scalar_select %p76, %s77, %s78
      %p82 = pneg %p76
      %p83 = scmp.eq.s32.totalorder %s25, 3
      %p84 = por %p82, %p83
      %p85 = scmp.ne.s32.totalorder %s77, %s80
      %p86 = scmp.eq.s32.totalorder %s25, 0
      %p87 = por %p85, %p86
      %p88 = scmp.ne.s32.totalorder %s77, %s80
      %p89 = scmp.eq.s32.totalorder %s30, 3
      %p90 = por %p88, %p89
      %p91 = scmp.ne.s32.totalorder %s80, %s81
      %p92 = scmp.eq.s32.totalorder %s30, 0
      %p93 = por %p91, %p92
      %p94 = scmp.ne.s32.totalorder %s80, %s81
      %p95 = scmp.eq.s32.totalorder %s31, 3
      %p96 = por %p94, %p95
      %p98 = scmp.ne.s32.totalorder %s81, %s97
      %p99 = scmp.eq.s32.totalorder %s31, 0
      %p100 = por %p98, %p99
      %s101 = ssub.s32 %s33, %s40
      %p102 = scmp.eq.s32.totalorder %s101, 0
      %s104 = sadd.s32 %s103, 1
      %s105 = scalar_select %p102, %s103, %s104
      %p108 = pneg %p102
      %p109 = scmp.eq.s32.totalorder %s25, 3
      %p110 = por %p108, %p109
      %p111 = scmp.ne.s32.totalorder %s103, %s106
      %p112 = scmp.eq.s32.totalorder %s25, 0
      %p113 = por %p111, %p112
      %p114 = scmp.ne.s32.totalorder %s103, %s106
      %p115 = scmp.eq.s32.totalorder %s30, 3
      %p116 = por %p114, %p115
      %p117 = scmp.ne.s32.totalorder %s106, %s107
      %p118 = scmp.eq.s32.totalorder %s30, 0
      %p119 = por %p117, %p118
      %p120 = scmp.ne.s32.totalorder %s106, %s107
      %p121 = scmp.eq.s32.totalorder %s31, 3
      %p122 = por %p120, %p121
      %p124 = scmp.ne.s32.totalorder %s107, %s123
      %p125 = scmp.eq.s32.totalorder %s31, 0
      %p126 = por %p124, %p125
      %s127 = ssub.s32 %s33, %s40
      %p128 = scmp.eq.s32.totalorder %s127, 0
      %s130 = sadd.s32 %s129, 1
      %s131 = scalar_select %p128, %s129, %s130
      %p134 = pneg %p128
      %p135 = scmp.eq.s32.totalorder %s25, 3
      %p136 = por %p134, %p135
      %p137 = scmp.ne.s32.totalorder %s129, %s132
      %p138 = scmp.eq.s32.totalorder %s25, 0
      %p139 = por %p137, %p138
      %p140 = scmp.ne.s32.totalorder %s129, %s132
      %p141 = scmp.eq.s32.totalorder %s30, 3
      %p142 = por %p140, %p141
      %p143 = scmp.ne.s32.totalorder %s132, %s133
      %p144 = scmp.eq.s32.totalorder %s30, 0
      %p145 = por %p143, %p144
      %p146 = scmp.ne.s32.totalorder %s132, %s133
      %p147 = scmp.eq.s32.totalorder %s31, 3
      %p148 = por %p146, %p147
      %p150 = scmp.ne.s32.totalorder %s133, %s149
      %p151 = scmp.eq.s32.totalorder %s31, 0
      %p152 = por %p150, %p151
      %s153 = ssub.s32 %s33, %s40
      %p154 = scmp.eq.s32.totalorder %s153, 0
      %s156 = sadd.s32 %s155, 1
      %s157 = scalar_select %p154, %s155, %s156
      %p160 = pneg %p154
      %p161 = scmp.eq.s32.totalorder %s25, 3
      %p162 = por %p160, %p161
      %p163 = scmp.ne.s32.totalorder %s155, %s158
      %p164 = scmp.eq.s32.totalorder %s25, 0
      %p165 = por %p163, %p164
      %p166 = scmp.ne.s32.totalorder %s155, %s158
      %p167 = scmp.eq.s32.totalorder %s30, 3
      %p168 = por %p166, %p167
      %p169 = scmp.ne.s32.totalorder %s158, %s159
      %p170 = scmp.eq.s32.totalorder %s30, 0
      %p171 = por %p169, %p170
      %p172 = scmp.ne.s32.totalorder %s158, %s159
      %p173 = scmp.eq.s32.totalorder %s31, 3
      %p174 = por %p172, %p173
      %p176 = scmp.ne.s32.totalorder %s159, %s175
      %p177 = scmp.eq.s32.totalorder %s31, 0
      %p178 = por %p176, %p177
      %s179 = ssub.s32 %s32, %s44
      %s180 = ssub.s32 %s33, %s40
      %s181 = sor.u32 %s179, %s180
      %p182 = scmp.eq.s32.totalorder %s181, 0
      %s184 = sadd.s32 %s183, 1
      %s185 = scalar_select %p182, %s183, %s184
      %p188 = pneg %p182
      %p189 = scmp.eq.s32.totalorder %s25, 3
      %p190 = por %p188, %p189
      %p191 = scmp.ne.s32.totalorder %s183, %s186
      %p192 = scmp.eq.s32.totalorder %s25, 0
      %p193 = por %p191, %p192
      %p194 = scmp.ne.s32.totalorder %s183, %s186
      %p195 = scmp.eq.s32.totalorder %s30, 3
      %p196 = por %p194, %p195
      %p197 = scmp.ne.s32.totalorder %s186, %s187
      %p198 = scmp.eq.s32.totalorder %s30, 0
      %p199 = por %p197, %p198
      %p200 = scmp.ne.s32.totalorder %s186, %s187
      %p201 = scmp.eq.s32.totalorder %s31, 3
      %p202 = por %p200, %p201
      %p204 = scmp.ne.s32.totalorder %s187, %s203
      %p205 = scmp.eq.s32.totalorder %s31, 0
      %p206 = por %p204, %p205
      %s207 = ssub.s32 %s32, %s44
      %s208 = ssub.s32 %s33, %s40
      %s209 = sor.u32 %s207, %s208
      %p210 = scmp.eq.s32.totalorder %s209, 0
      %s212 = sadd.s32 %s211, 1
      %s213 = scalar_select %p210, %s211, %s212
      %p216 = pneg %p210
      %p217 = scmp.eq.s32.totalorder %s25, 3
      %p218 = por %p216, %p217
      %p219 = scmp.ne.s32.totalorder %s211, %s214
      %p220 = scmp.eq.s32.totalorder %s25, 0
      %p221 = por %p219, %p220
      %p222 = scmp.ne.s32.totalorder %s211, %s214
      %p223 = scmp.eq.s32.totalorder %s30, 3
      %p224 = por %p222, %p223
      %p225 = scmp.ne.s32.totalorder %s214, %s215
      %p226 = scmp.eq.s32.totalorder %s30, 0
      %p227 = por %p225, %p226
      %p228 = scmp.ne.s32.totalorder %s214, %s215
      %p229 = scmp.eq.s32.totalorder %s31, 3
      %p230 = por %p228, %p229
      %p232 = scmp.ne.s32.totalorder %s215, %s231
      %p233 = scmp.eq.s32.totalorder %s31, 0
      %p234 = por %p232, %p233
      %p235 = scmp.le.s32.totalorder 1, %s25
      %p236 = scmp.lt.s32.totalorder %s25, 5
      %p237 = pnand %p235, %p236
      %p238 = pneg %p237
      // Predicated region
      $region9: #{llama_rotary_multiply_add.1} parent=5 // pred_check
        _
      $region10: #{llama_rotary_multiply_add.1} parent=5 // pred_check_branch
        %240 = sbr.rel (%p237) target = $region12
      $region11: #{llama_rotary_multiply_add.1} parent=5 // pred_region
        %s241 = ssub.s32 %s25, 1
        // Predicated region
        $region13: #{llama_rotary_multiply_add.1} parent=11 // pred_check
          %p242 = pneg %p119
        $region14: #{llama_rotary_multiply_add.1} parent=11 // pred_check_branch
          %244 = sbr.rel (%p242) target = $region16
        $region15: #{llama_rotary_multiply_add.1} parent=11 // pred_region
          %p245 = scmp.lt.s32.totalorder %s35, 0
          %s246 = scalar_select %p245, %s35, 0
          %s247 = smul.addr %s246, 8
          %s248 = scalar_lea.vmem %s2, %s247
        $region16: #{llama_rotary_multiply_add.1} parent=11 // pred_fallthru
          _
        // Predicated region
        $region17: #{llama_rotary_multiply_add.1} parent=11 // pred_check
          %p249 = pneg %p145
        $region18: #{llama_rotary_multiply_add.1} parent=11 // pred_check_branch
          %251 = sbr.rel (%p249) target = $region20
        $region19: #{llama_rotary_multiply_add.1} parent=11 // pred_region
          %p252 = scmp.lt.s32.totalorder %s35, 0
          %s253 = scalar_select %p252, %s35, 0
          %s254 = smul.addr %s253, 8
          %s255 = scalar_lea.vmem %s3, %s254
        $region20: #{llama_rotary_multiply_add.1} parent=11 // pred_fallthru
          _
        // Predicated region
        $region21: #{llama_rotary_multiply_add.1} parent=11 // pred_check
          %p256 = pneg %p171
        $region22: #{llama_rotary_multiply_add.1} parent=11 // pred_check_branch
          %258 = sbr.rel (%p256) target = $region24
        $region23: #{llama_rotary_multiply_add.1} parent=11 // pred_region
          %p259 = scmp.lt.s32.totalorder %s35, 0
          %s260 = scalar_select %p259, %s35, 0
          %s261 = smul.addr %s260, 8
          %s262 = scalar_lea.vmem %s4, %s261
        $region24: #{llama_rotary_multiply_add.1} parent=11 // pred_fallthru
          _
      $region12: #{llama_rotary_multiply_add.1} parent=5 // pred_fallthru
        _
      %p263 = scmp.lt.s32.totalorder %s25, 4
      // Predicated region
      $region25: #{llama_rotary_multiply_add.1} parent=5 // pred_check
        %p264 = pneg %p263
      $region26: #{llama_rotary_multiply_add.1} parent=5 // pred_check_branch
        %266 = sbr.rel (%p264) target = $region28
      $region27: #{llama_rotary_multiply_add.1} parent=5 // pred_region
        // Predicated region
        $region29: #{llama_rotary_multiply_add.1} parent=27 // pred_check
          %p267 = pneg %p59
        $region30: #{llama_rotary_multiply_add.1} parent=27 // pred_check_branch
          %269 = sbr.rel (%p267) target = $region32
        $region31: #{llama_rotary_multiply_add.1} parent=27 // pred_region
          %s270 = sand.u32 %s49, 1
          %s271 = scalar_lea.sflag [#allocation3], %s270
          %s272 = sand.u32 %s49, 1
          %s273 = smul.addr %s272, 32
          %s274 = scalar_lea.vmem [#allocation2], %s273
          %s275 = smul.u32 4, %s32
          %277 = vsyncadd %s271, 0
          %s278 = sadd.s32 %s33, %s275
          %s279 = smul.addr %s278, 8
          %s280 = scalar_lea.hbm %s0, %s279
          %s281 = sshll.u32 %s280, 4
          %s282 = int_to_ptr.hbm [resolvable:$true] %s281
          %s283 = sshll.u32 %s274, 4
          %s284 = int_to_ptr.vmem [resolvable:$true] %s283
          %289 = dma.hbm_to_vmem [thread:$0]  %s282, 512, %s284, %s271, 128, 128, 8
        $region32: #{llama_rotary_multiply_add.1} parent=27 // pred_fallthru
          _
        // Predicated region
        $region33: #{llama_rotary_multiply_add.1} parent=27 // pred_check
          %p290 = pneg %p87
        $region34: #{llama_rotary_multiply_add.1} parent=27 // pred_check_branch
          %292 = sbr.rel (%p290) target = $region36
        $region35: #{llama_rotary_multiply_add.1} parent=27 // pred_region
          %s293 = sand.u32 %s77, 1
          %s294 = scalar_lea.sflag [#allocation6], %s293
          %s295 = sand.u32 %s77, 1
          %s296 = smul.addr %s295, 8
          %s297 = scalar_lea.vmem [#allocation5], %s296
          %299 = vsyncadd %s294, 0
          %s300 = sadd.s32 %s33, %s32
          %s301 = smul.addr %s300, 8
          %s302 = scalar_lea.hbm %s1, %s301
          %s304 = sshll.u32 %s302, 4
          %s305 = int_to_ptr.hbm [resolvable:$true] %s304
          %s306 = sshll.u32 %s297, 4
          %s307 = int_to_ptr.vmem [resolvable:$true] %s306
          %309 = dma.hbm_to_vmem [thread:$0]  %s305, 128, %s307, %s294
        $region36: #{llama_rotary_multiply_add.1} parent=27 // pred_fallthru
          _
      $region28: #{llama_rotary_multiply_add.1} parent=5 // pred_fallthru
        _
      %p310 = scmp.le.s32.totalorder 1, %s25
      %p311 = scmp.lt.s32.totalorder %s25, 5
      %p312 = pnand %p310, %p311
      %p313 = pneg %p312
      // Predicated region
      $region37: #{llama_rotary_multiply_add.1} parent=5 // pred_check
        _
      $region38: #{llama_rotary_multiply_add.1} parent=5 // pred_check_branch
        %315 = sbr.rel (%p312) target = $region40
      $region39: #{llama_rotary_multiply_add.1} parent=5 // pred_region
        %s316 = ssub.s32 %s25, 1
        %s317 = sand.u32 %s52, 1
        %s318 = scalar_lea.sflag [#allocation3], %s317
        %s319 = sand.u32 %s52, 1
        %s320 = smul.addr %s319, 32
        %s321 = scalar_lea.vmem [#allocation2], %s320
        // Predicated region
        $region41: #{llama_rotary_multiply_add.1} parent=39 // pred_check
          %p322 = pneg %p65
        $region42: #{llama_rotary_multiply_add.1} parent=39 // pred_check_branch
          %324 = sbr.rel (%p322) target = $region44
        $region43: #{llama_rotary_multiply_add.1} parent=39 // pred_region
          %326 = dma.done %s318, 512
        $region44: #{llama_rotary_multiply_add.1} parent=39 // pred_fallthru
          _
        %s327 = sand.u32 %s80, 1
        %s328 = scalar_lea.sflag [#allocation6], %s327
        %s329 = sand.u32 %s80, 1
        %s330 = smul.addr %s329, 8
        %s331 = scalar_lea.vmem [#allocation5], %s330
        // Predicated region
        $region45: #{llama_rotary_multiply_add.1} parent=39 // pred_check
          %p332 = pneg %p93
        $region46: #{llama_rotary_multiply_add.1} parent=39 // pred_check_branch
          %334 = sbr.rel (%p332) target = $region48
        $region47: #{llama_rotary_multiply_add.1} parent=39 // pred_region
          %336 = dma.done %s328, 128
        $region48: #{llama_rotary_multiply_add.1} parent=39 // pred_fallthru
          _
        %s337 = sand.u32 %s52, 1
        %s338 = scalar_lea.sflag [#allocation3], %s337
        %s339 = sand.u32 %s52, 1
        %s340 = smul.addr %s339, 32
        %s341 = scalar_lea.vmem [#allocation2], %s340
        %p342 = pneg %p65
        %p343 = pneg %p62
        %s344 = sand.u32 %s80, 1
        %s345 = scalar_lea.sflag [#allocation6], %s344
        %s346 = sand.u32 %s80, 1
        %s347 = smul.addr %s346, 8
        %s348 = scalar_lea.vmem [#allocation5], %s347
        %p349 = pneg %p93
        %p350 = pneg %p90
        %p351 = scmp.lt.s32.totalorder %s35, 0
        %s352 = scalar_select %p351, %s35, 0
        %s353 = smul.addr %s352, 8
        %s354 = scalar_lea.vmem %s2, %s353
        %p355 = pneg %p119
        %p356 = pneg %p116
        %p357 = scmp.lt.s32.totalorder %s35, 0
        %s358 = scalar_select %p357, %s35, 0
        %s359 = smul.addr %s358, 8
        %s360 = scalar_lea.vmem %s3, %s359
        %p361 = pneg %p145
        %p362 = pneg %p142
        %p363 = scmp.lt.s32.totalorder %s35, 0
        %s364 = scalar_select %p363, %s35, 0
        %s365 = smul.addr %s364, 8
        %s366 = scalar_lea.vmem %s4, %s365
        %p367 = pneg %p171
        %p368 = pneg %p168
        %p369 = pneg %p199
        %p370 = pneg %p196
        %s371 = sand.u32 %s186, 1
        %s372 = scalar_lea.sflag [#allocation4], %s371
        %s373 = sand.u32 %s186, 1
        %s374 = smul.addr %s373, 32
        %s375 = scalar_lea.vmem [#allocation7], %s374
        %p376 = pneg %p227
        %p377 = pneg %p224
        %s378 = sand.u32 %s214, 1
        %s379 = scalar_lea.sflag [#allocation9], %s378
        %s380 = sand.u32 %s214, 1
        %s381 = smul.addr %s380, 8
        %s382 = scalar_lea.vmem [#allocation8], %s381
        %s383 = smul.u32 4, %s34
        %p384 = scmp.lt.s32.totalorder %s35, 0
        %s385 = scalar_select %p384, %s35, 0
        %s386 = smul.addr %s385, 8
        %s387 = scalar_lea.vmem %s2, %s386
        %p388 = scmp.lt.s32.totalorder %s35, 0
        %s389 = scalar_select %p388, %s35, 0
        %s390 = smul.addr %s389, 8
        %s391 = scalar_lea.vmem %s3, %s390
        %p392 = scmp.lt.s32.totalorder %s35, 0
        %s393 = scalar_select %p392, %s35, 0
        %s394 = smul.addr %s393, 8
        %s395 = scalar_lea.vmem %s4, %s394
        %s396 = smul.u32 4, %s34
        %v397 = vld [vmem:[%s387] sm:$0xff]
        %v398 = vld [vmem:[%s391] sm:$0xff]
        %v399 = vld [vmem:[%s395] sm:$0xff]
        %v400 = vld [vmem:[%s321] sm:$0xff]
        %v401 = vld [vmem:[%s321 + $0x8] sm:$0xff]
        %v402 = vld [vmem:[%s321 + $0x10] sm:$0xff]
        %v403 = vld [vmem:[%s321 + $0x18] sm:$0xff]
        %404 = vrot.lane.b32.xlu0 %v400, 127
        %v405 = vpop.permute.xlu0 %404
        %406 = vrot.lane.b32.xlu0 %v401, 127
        %v407 = vpop.permute.xlu0 %406
        %408 = vrot.lane.b32.xlu0 %v402, 127
        %v409 = vpop.permute.xlu0 %408
        %410 = vrot.lane.b32.xlu0 %v403, 127
        %v411 = vpop.permute.xlu0 %410
        %412 = vrot.lane.b32.xlu0 %v400, 1
        %v413 = vpop.permute.xlu0 %412
        %414 = vrot.lane.b32.xlu0 %v401, 1
        %v415 = vpop.permute.xlu0 %414
        %416 = vrot.lane.b32.xlu0 %v402, 1
        %v417 = vpop.permute.xlu0 %416
        %418 = vrot.lane.b32.xlu0 %v403, 1
        %v419 = vpop.permute.xlu0 %418
        %v420 = vmul.f32 %v400, %v397
        %v421 = vmul.f32 %v401, %v397
        %v422 = vmul.f32 %v402, %v397
        %v423 = vmul.f32 %v403, %v397
        %v424 = vmul.f32 %v405, %v398
        %v425 = vmul.f32 %v407, %v398
        %v426 = vmul.f32 %v409, %v398
        %v427 = vmul.f32 %v411, %v398
        %v428 = vadd.f32 %v420, %v424
        %v429 = vadd.f32 %v421, %v425
        %v430 = vadd.f32 %v422, %v426
        %v431 = vadd.f32 %v423, %v427
        %v432 = vmul.f32 %v413, %v399
        %v433 = vmul.f32 %v415, %v399
        %v434 = vmul.f32 %v417, %v399
        %v435 = vmul.f32 %v419, %v399
        %v436 = vadd.f32 %v428, %v432
        %v437 = vadd.f32 %v429, %v433
        %v438 = vadd.f32 %v430, %v434
        %v439 = vadd.f32 %v431, %v435
        %440 = vst [vmem:[%s375] sm:$0xff] %v436
        %441 = vst [vmem:[%s375 + $0x8] sm:$0xff] %v437
        %442 = vst [vmem:[%s375 + $0x10] sm:$0xff] %v438
        %443 = vst [vmem:[%s375 + $0x18] sm:$0xff] %v439
        %v444 = vld [vmem:[%s331] sm:$0xff]
        %445 = vrot.lane.b32.xlu0 %v444, 127
        %v446 = vpop.permute.xlu0 %445
        %447 = vrot.lane.b32.xlu0 %v444, 1
        %v448 = vpop.permute.xlu0 %447
        %v449 = vmul.f32 %v444, %v397
        %v450 = vmul.f32 %v446, %v398
        %v451 = vadd.f32 %v449, %v450
        %v452 = vmul.f32 %v448, %v399
        %v453 = vadd.f32 %v451, %v452
        %454 = vst [vmem:[%s382] sm:$0xff] %v453
        %s455 = sand.u32 %s186, 1
        %s456 = scalar_lea.sflag [#allocation4], %s455
        %s457 = sand.u32 %s186, 1
        %s458 = smul.addr %s457, 32
        %s459 = scalar_lea.vmem [#allocation7], %s458
        %s460 = sand.u32 %s214, 1
        %s461 = scalar_lea.sflag [#allocation9], %s460
        %s462 = sand.u32 %s214, 1
        %s463 = smul.addr %s462, 8
        %s464 = scalar_lea.vmem [#allocation8], %s463
        // Predicated region
        $region49: #{llama_rotary_multiply_add.1} parent=39 // pred_check
          %p465 = pneg %p196
        $region50: #{llama_rotary_multiply_add.1} parent=39 // pred_check_branch
          %467 = sbr.rel (%p465) target = $region52
        $region51: #{llama_rotary_multiply_add.1} parent=39 // pred_region
          %s468 = smul.u32 4, %s34
          %470 = vsyncadd %s456, 0
          %s471 = sadd.s32 %s35, %s468
          %s472 = smul.addr %s471, 8
          %s473 = scalar_lea.hbm %s5, %s472
          %s474 = sshll.u32 %s459, 4
          %s475 = int_to_ptr.vmem [resolvable:$true] %s474
          %s476 = sshll.u32 %s473, 4
          %s477 = int_to_ptr.hbm [resolvable:$true] %s476
          %482 = dma.vmem_to_hbm [thread:$0]  %s475, 512, %s477, %s456, 128, 128, 8
        $region52: #{llama_rotary_multiply_add.1} parent=39 // pred_fallthru
          _
        // Predicated region
        $region53: #{llama_rotary_multiply_add.1} parent=39 // pred_check
          %p483 = pneg %p224
        $region54: #{llama_rotary_multiply_add.1} parent=39 // pred_check_branch
          %485 = sbr.rel (%p483) target = $region56
        $region55: #{llama_rotary_multiply_add.1} parent=39 // pred_region
          %487 = vsyncadd %s461, 0
          %s488 = sadd.s32 %s35, %s34
          %s489 = smul.addr %s488, 8
          %s490 = scalar_lea.hbm %s6, %s489
          %s492 = sshll.u32 %s464, 4
          %s493 = int_to_ptr.vmem [resolvable:$true] %s492
          %s494 = sshll.u32 %s490, 4
          %s495 = int_to_ptr.hbm [resolvable:$true] %s494
          %497 = dma.vmem_to_hbm [thread:$0]  %s493, 128, %s495, %s461
        $region56: #{llama_rotary_multiply_add.1} parent=39 // pred_fallthru
          _
      $region40: #{llama_rotary_multiply_add.1} parent=5 // pred_fallthru
        _
      %p498 = scmp.le.s32.totalorder 2, %s25
      // Predicated region
      $region57: #{llama_rotary_multiply_add.1} parent=5 // pred_check
        %p499 = pneg %p498
      $region58: #{llama_rotary_multiply_add.1} parent=5 // pred_check_branch
        %501 = sbr.rel (%p499) target = $region60
      $region59: #{llama_rotary_multiply_add.1} parent=5 // pred_region
        %s502 = ssub.s32 %s25, 2
        // Predicated region
        $region61: #{llama_rotary_multiply_add.1} parent=59 // pred_check
          %p503 = pneg %p202
        $region62: #{llama_rotary_multiply_add.1} parent=59 // pred_check_branch
          %505 = sbr.rel (%p503) target = $region64
        $region63: #{llama_rotary_multiply_add.1} parent=59 // pred_region
          %s506 = sand.u32 %s187, 1
          %s507 = scalar_lea.sflag [#allocation4], %s506
          %s508 = sand.u32 %s187, 1
          %s509 = smul.addr %s508, 32
          %s510 = scalar_lea.vmem [#allocation7], %s509
          %512 = dma.done %s507, 512
        $region64: #{llama_rotary_multiply_add.1} parent=59 // pred_fallthru
          _
        // Predicated region
        $region65: #{llama_rotary_multiply_add.1} parent=59 // pred_check
          %p513 = pneg %p230
        $region66: #{llama_rotary_multiply_add.1} parent=59 // pred_check_branch
          %515 = sbr.rel (%p513) target = $region68
        $region67: #{llama_rotary_multiply_add.1} parent=59 // pred_region
          %s516 = sand.u32 %s215, 1
          %s517 = scalar_lea.sflag [#allocation9], %s516
          %s518 = sand.u32 %s215, 1
          %s519 = smul.addr %s518, 8
          %s520 = scalar_lea.vmem [#allocation8], %s519
          %522 = dma.done %s517, 128
        $region68: #{llama_rotary_multiply_add.1} parent=59 // pred_fallthru
          _
      $region60: #{llama_rotary_multiply_add.1} parent=5 // pred_fallthru
        _
    $region6: #{llama_rotary_multiply_add.1} parent=1 // loop_footer
      %s29 = sadd.s32 1, %s25
    $region7: #{llama_rotary_multiply_add.1} parent=1 // loop_footer_branch
      %24 = sbr.rel target = $region3
    $region8: #{llama_rotary_multiply_add.1} parent=1 // loop_exit
      _
    %523 = vsyncpa [#allocation3], 1
    %s524 = scalar_lea.sflag [#allocation3], 1
    %525 = vsyncpa %s524, 1
    %526 = vsyncpa [#allocation6], 1
    %s527 = scalar_lea.sflag [#allocation6], 1
    %528 = vsyncpa %s527, 1
    %529 = vsyncpa [#allocation4], 1
    %s530 = scalar_lea.sflag [#allocation4], 1
    %531 = vsyncpa %s530, 1
    %532 = vsyncpa [#allocation9], 1
    %s533 = scalar_lea.sflag [#allocation9], 1
    %534 = vsyncpa %s533, 1

</llo_original>
